<compile_context>
chip_gen: v7x
topology: tpu7x:2x2x1
jax: 0.10.0
libtpu: 0.0.40
codegen_flags: <defaults>
</compile_context>

<pallas_src>
import math

import numpy as np
import jax
import jax.numpy as jnp
from jax import lax
from jax.experimental import pallas as pl
from jax.experimental.pallas import tpu as pltpu


def _vmem_spec():
    # Whole array resident in VMEM (everything here is tiny; no grid needed).
    return pl.BlockSpec(memory_space=pltpu.MemorySpace.VMEM)


# -----------------------------------------------------------------------------
# Bilinear interpolation matrix (torch F.interpolate, mode='bilinear',
# align_corners=False == half-pixel centers, no antialias).
# -----------------------------------------------------------------------------
def bilinear_matrix(in_size, out_size):
    m = np.zeros((out_size, in_size), dtype=np.float64)
    scale = in_size / out_size
    for o in range(out_size):
        src = max((o + 0.5) * scale - 0.5, 0.0)
        f = int(math.floor(src))
        frac = src - f
        i0 = min(max(f, 0), in_size - 1)
        i1 = min(max(f + 1, 0), in_size - 1)
        m[o, i0] += 1.0 - frac
        m[o, i1] += frac
    return m


# -----------------------------------------------------------------------------
# Single fused kernel:  relu(x @ M1 + b1) @ W2 + b2
#   x_ref  [B, C*H*W]           flattened input (torch NCHW flatten order)
#   m1_ref [C*H*W, C'*Ho*N]     exact fold of conv -> resize -> dense (no bias)
#   b1_ref [1, C'*Ho*N]         DenseGene bias in (c, ho, n) flatten order
#   w2_ref [C'*Ho*N, n_out]     output Linear
#   b2_ref [1, n_out]           output Linear bias
#   o_ref  [B, n_out]
# -----------------------------------------------------------------------------
def _net_kernel(x_ref, m1_ref, b1_ref, w2_ref, b2_ref, o_ref):
    h = jnp.dot(x_ref[...], m1_ref[...], preferred_element_type=jnp.float32)
    h = jnp.maximum(h + b1_ref[...], 0.0)                      # DenseGene bias + relu
    o_ref[...] = (jnp.dot(h, w2_ref[...], preferred_element_type=jnp.float32)
                  + b2_ref[...])                                # output Linear


# -----------------------------------------------------------------------------
# Public wrapper: one free reshape at the NCHW boundary, then one pallas_call.
# -----------------------------------------------------------------------------
def _net_forward_impl(x_nchw, params):
    b = x_nchw.shape[0]
    x_flat = x_nchw.reshape(b, -1)            # torch flatten order; no transpose
    n_out = params['b2'].shape[1]
    return pl.pallas_call(
        _net_kernel,
        out_shape=jax.ShapeDtypeStruct((b, n_out), jnp.float32),
        in_specs=[_vmem_spec()] * 5,
        out_specs=_vmem_spec(),
    )(x_flat, params['m1'], params['b1'], params['w2'], params['b2'])


net_forward = jax.jit(_net_forward_impl)


# -----------------------------------------------------------------------------
# Raw (PyTorch-style) parameters for the fixed genome.
# -----------------------------------------------------------------------------
def init_raw_params(key, c_in=4, depth_mult=2, depth_size_change=2,
                    h=16, w=16, ho=8, wo=8, out_size=10):
    ks = jax.random.split(key, 6)
    c_dw = c_in * depth_mult
    c_pw = c_in + depth_size_change

    def u(k, shape, fan_in):
        bnd = 1.0 / math.sqrt(fan_in)
        return jax.random.uniform(k, shape, jnp.float32, -bnd, bnd)

    return {
        'dw_w_oihw': u(ks[0], (c_dw, 1, 3, 3), 9),        # depthwise conv, no bias
        'pw_w_oi':   u(ks[1], (c_pw, c_dw), c_dw),        # pointwise conv, no bias
        'dense_w':   u(ks[2], (wo, wo), wo),              # DenseGene Linear (in->out)
        'dense_b':   u(ks[3], (wo,), wo),
        'out_w':     u(ks[4], (c_pw * ho * wo, out_size), c_pw * ho * wo),
        'out_b':     u(ks[5], (out_size,), c_pw * ho * wo),
        'rh': jnp.asarray(bilinear_matrix(h, ho), jnp.float32),   # [ho, h]
        'rw': jnp.asarray(bilinear_matrix(w, wo), jnp.float32),   # [wo, w]
    }


# -----------------------------------------------------------------------------
# Host-side exact fold of the linear prefix (conv -> resize -> dense w/o bias).
# -----------------------------------------------------------------------------
def _linear_prefix_np(x_chw, raw, depth_mult):
    """Apply the (purely linear) prefix of the net to a numpy batch.

    x_chw: [K, C_in, H, W] float64.  Returns [K, C_pw*Ho*N] flattened in torch
    (c, h, w) order.  No bias, no activation -> linear in x.
    """
    dw = np.asarray(raw['dw_w_oihw'], np.float64)       # [c_dw, 1, 3, 3]
    pw = np.asarray(raw['pw_w_oi'], np.float64)         # [c_pw, c_dw]
    rh = np.asarray(raw['rh'], np.float64)              # [ho, h]
    rw = np.asarray(raw['rw'], np.float64)               # [wo, w]
    dsw = np.asarray(raw['dense_w'], np.float64)         # [wo, n]

    k, c_in, h, w = x_chw.shape
    c_dw = dw.shape[0]
    rep = np.repeat(np.arange(c_in), depth_mult)          # dw out-chan -> in-chan (groups=c_in)

    xpad = np.zeros((k, c_in, h + 2, w + 2), np.float64)
    xpad[:, :, 1:-1, 1:-1] = x_chw
    y = np.zeros((k, c_dw, h, w), np.float64)
    for di in range(3):                                   # depthwise 3x3, stride 1, pad 1
        for dj in range(3):
            y += xpad[:, rep, di:di + h, dj:dj + w] * dw[None, :, 0, di, dj, None, None]
    y = np.einsum('kdhw,od->kohw', y, pw)                 # pointwise 1x1
    y = np.einsum('kchw,pw->kchp', y, rw)                 # bilinear resize, W
    y = np.einsum('kchp,qh->kcqp', y, rh)                 # bilinear resize, H
    y = np.einsum('kcqw,wn->kcqn', y, dsw)                # DenseGene Linear (bias added in-kernel)
    return y.reshape(k, -1)                               # torch (c, q, n) flatten order


def fold_params(raw, *, depth_mult=2):
    c_in = raw['dw_w_oihw'].shape[0] // depth_mult
    c_pw = raw['pw_w_oi'].shape[0]
    ho, h = raw['rh'].shape
    _, w = raw['rw'].shape

    # Exact fold: evaluate the linear prefix on the canonical basis of the
    # flattened input space.  Row k of M1 is prefix(e_k).
    basis = np.eye(c_in * h * w, dtype=np.float64).reshape(-1, c_in, h, w)
    m1 = _linear_prefix_np(basis, raw, depth_mult)                    # [C*H*W, C_pw*Ho*N]
    b1 = np.tile(np.asarray(raw['dense_b'], np.float64), c_pw * ho)   # bias in (c, q, n) order

    return {
        'm1': jnp.asarray(m1, jnp.float32),
        'b1': jnp.asarray(b1[None, :], jnp.float32),
        'w2': jnp.asarray(raw['out_w'], jnp.float32),
        'b2': jnp.asarray(np.asarray(raw['out_b'])[None, :], jnp.float32),
    }


# -----------------------------------------------------------------------------
# Pure-JAX reference (raw params, standard op order) for the correctness check.
# -----------------------------------------------------------------------------
def reference_forward(x, p):
    hp = lax.Precision.HIGHEST
    dw = lax.conv_general_dilated(x, p['dw_w_oihw'], (1, 1), ((1, 1), (1, 1)),
                                  dimension_numbers=('NCHW', 'OIHW', 'NCHW'),
                                  feature_group_count=x.shape[1], precision=hp)
    pw = jnp.einsum('bdhw,od->bohw', dw, p['pw_w_oi'], precision=hp)
    r = jnp.einsum('bchw,pw->bchp', pw, p['rw'], precision=hp)
    r = jnp.einsum('bchp,qh->bcqp', r, p['rh'], precision=hp)
    d = jax.nn.relu(jnp.einsum('bchw,wn->bchn', r, p['dense_w'], precision=hp)
                    + p['dense_b'])
    # TODO(synk): general ZeroPad2d 'padding' merge for mismatched sizes omitted
    # (sizes already match for this genome, so it is a no-op).
    flat = d.reshape(d.shape[0], -1)
    return jnp.einsum('bf,fo->bo', flat, p['out_w'], precision=hp) + p['out_b']


if __name__ == "__main__":
    key = jax.random.PRNGKey(0)
    kx, kparam = jax.random.split(key)
    x = jax.random.normal(kx, (2, 4, 16, 16), jnp.float32)   # NCHW, like PyTorch

    raw = init_raw_params(kparam)
    params = fold_params(raw, depth_mult=2)

    out = jax.block_until_ready(net_forward(x, params))

    ref = reference_forward(x, raw)
    # Kernel matmuls run at default MXU precision, the reference at HIGHEST
    # precision -> allow a small tolerance.
    np.testing.assert_allclose(np.asarray(out), np.asarray(ref), rtol=2e-2, atol=2e-2)
    assert out.shape == (2, 10)
    print("KERNEL_OK")
</pallas_src>

<mosaic_0001>
module attributes {stable_mosaic.version = 11 : i64} {
  func.func @_net_kernel(%arg0: memref<2x1024xf32, #tpu.memory_space<vmem>>, %arg1: memref<1024x384xf32, #tpu.memory_space<vmem>>, %arg2: memref<1x384xf32, #tpu.memory_space<vmem>>, %arg3: memref<384x10xf32, #tpu.memory_space<vmem>>, %arg4: memref<1x10xf32, #tpu.memory_space<vmem>>, %arg5: memref<2x10xf32, #tpu.memory_space<vmem>>) attributes {dimension_semantics = [], scalar_prefetch = 0 : i64, scratch_operands = 0 : i64, tpu.core_type = #tpu.core_type<tc>} {
    %c0 = arith.constant 0 : index
    %c0_0 = arith.constant 0 : index
    %0 = vector.load %arg0[%c0, %c0_0] : memref<2x1024xf32, #tpu.memory_space<vmem>>, vector<2x1024xf32>
    %c0_1 = arith.constant 0 : index
    %c0_2 = arith.constant 0 : index
    %1 = vector.load %arg1[%c0_1, %c0_2] : memref<1024x384xf32, #tpu.memory_space<vmem>>, vector<1024x384xf32>
    %cst = arith.constant dense<0.000000e+00> : vector<2x384xf32>
    %2 = tpu.matmul %0, %1, %cst {dimension_numbers = #tpu.dot_dimension_numbers<[1], [0], [0], [1], [0, 0, 1, 1], [], []>} : vector<2x1024xf32>, vector<1024x384xf32>, vector<2x384xf32> -> vector<2x384xf32>
    %c0_3 = arith.constant 0 : index
    %c0_4 = arith.constant 0 : index
    %3 = vector.load %arg2[%c0_3, %c0_4] : memref<1x384xf32, #tpu.memory_space<vmem>>, vector<1x384xf32>
    %4 = vector.broadcast %3 : vector<1x384xf32> to vector<2x384xf32>
    %5 = arith.addf %2, %4 : vector<2x384xf32>
    %cst_5 = arith.constant 0.000000e+00 : f32
    %6 = vector.broadcast %cst_5 : f32 to vector<2x384xf32>
    %7 = arith.maximumf %5, %6 : vector<2x384xf32>
    %c0_6 = arith.constant 0 : index
    %c0_7 = arith.constant 0 : index
    %8 = vector.load %arg3[%c0_6, %c0_7] : memref<384x10xf32, #tpu.memory_space<vmem>>, vector<384x10xf32>
    %cst_8 = arith.constant dense<0.000000e+00> : vector<2x10xf32>
    %9 = tpu.matmul %7, %8, %cst_8 {dimension_numbers = #tpu.dot_dimension_numbers<[1], [0], [0], [1], [0, 0, 1, 1], [], []>} : vector<2x384xf32>, vector<384x10xf32>, vector<2x10xf32> -> vector<2x10xf32>
    %c0_9 = arith.constant 0 : index
    %c0_10 = arith.constant 0 : index
    %10 = vector.load %arg4[%c0_9, %c0_10] : memref<1x10xf32, #tpu.memory_space<vmem>>, vector<1x10xf32>
    %11 = vector.broadcast %10 : vector<1x10xf32> to vector<2x10xf32>
    %12 = arith.addf %9, %11 : vector<2x10xf32>
    %c0_11 = arith.constant 0 : index
    %c0_12 = arith.constant 0 : index
    %13 = vector.load %arg5[%c0_11, %c0_12] : memref<2x10xf32, #tpu.memory_space<vmem>>, vector<2x10xf32>
    tpu.vector_store %arg5[%c0_11, %c0_12], %12 {strides = array<i32>} : memref<2x10xf32, #tpu.memory_space<vmem>>, vector<2x10xf32>,
    return
  }
}

</mosaic_0001>

<llo_original>
// kernel: _net_forward_impl.1
$region0: #{_net_forward_impl.1}
  #allocation0 [shape = 'u32[]', space=smem, size = 0x4, offset = 0x4, fixed_abs, tag = 'smem constant byte address 0x4 - core index']
  #allocation1 [shape = 'u32[144,128]{1,0:T(1,128)}', space=vmem, size = 0x12000, scoped, tag = 'internal scratch']
  %s0 = inlined_call_operand.vmem [shape: f32[2,1024], index: 0, kind: input, shape index: {}]
  %s1 = inlined_call_operand.hbm [shape: f32[1024,384], index: 1, kind: input, shape index: {}]
  %s2 = inlined_call_operand.hbm [shape: f32[1,384], index: 2, kind: input, shape index: {}]
  %s3 = inlined_call_operand.vmem [shape: f32[384,10], index: 3, kind: input, shape index: {}]
  %s4 = inlined_call_operand.hbm [shape: f32[1,10], index: 4, kind: input, shape index: {}]
  %s5 = inlined_call_operand.hbm [shape: f32[2,10], index: 5, kind: output, shape index: {}]
  %s6 = sld [smem:[#allocation0]]
  $region42: #{_net_forward_impl.1} parent=0
    _
  %s8 = ssub.s32 1, %s6
  %s9 = scalar_select 0, %s8, %s6
  $region1: #{_net_forward_impl.1} parent=0
    #allocation2 [shape = 'u8[1572864]{0}', space=vmem, size = 0x180000, scoped, tag = 'input window, operand 1, single buffered']
    #allocation3 [shape = 's32[1]{0}', space=sflag, size = 0x4, scoped, tag = 'scoped memory for _net_forward_impl.1']
    #allocation4 [shape = 's32[1]{0}', space=sflag, size = 0x4, scoped, tag = 'scoped memory for _net_forward_impl.1']
    #allocation5 [shape = 'u8[1536]{0}', space=vmem, size = 0x800, scoped, tag = 'input window, operand 2, single buffered']
    #allocation6 [shape = 's32[1]{0}', space=sflag, size = 0x4, scoped, tag = 'scoped memory for _net_forward_impl.1']
    #allocation7 [shape = 'u8[512]{0}', space=vmem, size = 0x400, scoped, tag = 'input window, operand 4, single buffered']
    #allocation8 [shape = 'u8[1024]{0}', space=vmem, size = 0x400, scoped, tag = 'output window, operand 0, single buffered']
    %10 = vsyncpa [#allocation3], 0
    %11 = vsyncpa [#allocation6], 0
    %12 = vsyncpa [#allocation4], 0
    // Predicated region
    $region2: #{_net_forward_impl.1} parent=1 // pred_check
      _
    $region3: #{_net_forward_impl.1} parent=1 // pred_check_branch
      %14 = sbr.rel (0) target = $region5
    $region4: #{_net_forward_impl.1} parent=1 // pred_region
      _
    $region5: #{_net_forward_impl.1} parent=1 // pred_fallthru
      _
    // Predicated region
    $region6: #{_net_forward_impl.1} parent=1 // pred_check
      _
    $region7: #{_net_forward_impl.1} parent=1 // pred_check_branch
      %16 = sbr.rel (0) target = $region9
    $region8: #{_net_forward_impl.1} parent=1 // pred_region
      %s18 = ssub.s32 49152, 49152
      %19 = vsyncadd [#allocation3], %s18
      %s20 = sshll.u32 [#allocation2], 4
      %s21 = int_to_ptr.vmem [resolvable:$true] %s20
      %26 = dma.hbm_to_vmem [thread:$0]  %s1, 49152, %s21, [#allocation3], 384, 384, 24
    $region9: #{_net_forward_impl.1} parent=1 // pred_fallthru
      _
    // Predicated region
    $region10: #{_net_forward_impl.1} parent=1 // pred_check
      _
    $region11: #{_net_forward_impl.1} parent=1 // pred_check_branch
      %28 = sbr.rel (0) target = $region13
    $region12: #{_net_forward_impl.1} parent=1 // pred_region
      %s30 = ssub.s32 48, 48
      %31 = vsyncadd [#allocation6], %s30
      %s33 = sshll.u32 [#allocation5], 4
      %s34 = int_to_ptr.vmem [resolvable:$true] %s33
      %36 = dma.hbm_to_vmem [thread:$0]  %s2, 48, %s34, [#allocation6]
    $region13: #{_net_forward_impl.1} parent=1 // pred_fallthru
      _
    // Predicated region
    $region14: #{_net_forward_impl.1} parent=1 // pred_check
      _
    $region15: #{_net_forward_impl.1} parent=1 // pred_check_branch
      %38 = sbr.rel (0) target = $region17
    $region16: #{_net_forward_impl.1} parent=1 // pred_region
      _
    $region17: #{_net_forward_impl.1} parent=1 // pred_fallthru
      _
    // Predicated region
    $region18: #{_net_forward_impl.1} parent=1 // pred_check
      _
    $region19: #{_net_forward_impl.1} parent=1 // pred_check_branch
      %40 = sbr.rel (0) target = $region21
    $region20: #{_net_forward_impl.1} parent=1 // pred_region
      %s42 = ssub.s32 16, 16
      %43 = vsyncadd [#allocation6], %s42
      %s45 = sshll.u32 [#allocation7], 4
      %s46 = int_to_ptr.vmem [resolvable:$true] %s45
      %48 = dma.hbm_to_vmem [thread:$0]  %s4, 16, %s46, [#allocation6]
    $region21: #{_net_forward_impl.1} parent=1 // pred_fallthru
      _
    // Predicated region
    $region22: #{_net_forward_impl.1} parent=1 // pred_check
      _
    $region23: #{_net_forward_impl.1} parent=1 // pred_check_branch
      %50 = sbr.rel (0) target = $region25
    $region24: #{_net_forward_impl.1} parent=1 // pred_region
      %51 = dma.done [#allocation3], 49152
    $region25: #{_net_forward_impl.1} parent=1 // pred_fallthru
      _
    // Predicated region
    $region26: #{_net_forward_impl.1} parent=1 // pred_check
      _
    $region27: #{_net_forward_impl.1} parent=1 // pred_check_branch
      %53 = sbr.rel (0) target = $region29
    $region28: #{_net_forward_impl.1} parent=1 // pred_region
      %54 = dma.done [#allocation6], 48
    $region29: #{_net_forward_impl.1} parent=1 // pred_fallthru
      _
    // Predicated region
    $region30: #{_net_forward_impl.1} parent=1 // pred_check
      _
    $region31: #{_net_forward_impl.1} parent=1 // pred_check_branch
      %56 = sbr.rel (0) target = $region33
    $region32: #{_net_forward_impl.1} parent=1 // pred_region
      %57 = dma.done [#allocation6], 16
    $region33: #{_net_forward_impl.1} parent=1 // pred_fallthru
      _
    %v58 = vld [vmem:[%s0] sm:$0xff]
    %v59 = vld [vmem:[%s0 + $0x8] sm:$0xff]
    %v60 = vld [vmem:[#allocation2] sm:$0xff]
    %v61 = vld [vmem:[#allocation2 + $0x8] sm:$0xff]
    %v62 = vld [vmem:[#allocation2 + $0x10] sm:$0xff]
    %v63 = vld [vmem:[#allocation2 + $0x18] sm:$0xff]
    %v64 = vld [vmem:[#allocation2 + $0x20] sm:$0xff]
    %v65 = vld [vmem:[#allocation2 + $0x28] sm:$0xff]
    %v66 = vld [vmem:[#allocation2 + $0x30] sm:$0xff]
    %v67 = vld [vmem:[#allocation2 + $0x38] sm:$0xff]
    %v68 = vld [vmem:[#allocation2 + $0x40] sm:$0xff]
    %v69 = vld [vmem:[#allocation2 + $0x48] sm:$0xff]
    %v70 = vld [vmem:[#allocation2 + $0x50] sm:$0xff]
    %v71 = vld [vmem:[#allocation2 + $0x58] sm:$0xff]
    %v72 = vld [vmem:[#allocation2 + $0x60] sm:$0xff]
    %v73 = vld [vmem:[#allocation2 + $0x68] sm:$0xff]
    %v74 = vld [vmem:[#allocation2 + $0x70] sm:$0xff]
    %v75 = vld [vmem:[#allocation2 + $0x78] sm:$0xff]
    %v76 = vld [vmem:[#allocation2 + $0x80] sm:$0xff]
    %v77 = vld [vmem:[#allocation2 + $0x88] sm:$0xff]
    %v78 = vld [vmem:[#allocation2 + $0x90] sm:$0xff]
    %v79 = vld [vmem:[#allocation2 + $0x98] sm:$0xff]
    %v80 = vld [vmem:[#allocation2 + $0xa0] sm:$0xff]
    %v81 = vld [vmem:[#allocation2 + $0xa8] sm:$0xff]
    %v82 = vld [vmem:[#allocation2 + $0xb0] sm:$0xff]
    %v83 = vld [vmem:[#allocation2 + $0xb8] sm:$0xff]
    %v84 = vld [vmem:[#allocation2 + $0xc0] sm:$0xff]
    %v85 = vld [vmem:[#allocation2 + $0xc8] sm:$0xff]
    %v86 = vld [vmem:[#allocation2 + $0xd0] sm:$0xff]
    %v87 = vld [vmem:[#allocation2 + $0xd8] sm:$0xff]
    %v88 = vld [vmem:[#allocation2 + $0xe0] sm:$0xff]
    %v89 = vld [vmem:[#allocation2 + $0xe8] sm:$0xff]
    %v90 = vld [vmem:[#allocation2 + $0xf0] sm:$0xff]
    %v91 = vld [vmem:[#allocation2 + $0xf8] sm:$0xff]
    %v92 = vld [vmem:[#allocation2 + $0x100] sm:$0xff]
    %v93 = vld [vmem:[#allocation2 + $0x108] sm:$0xff]
    %v94 = vld [vmem:[#allocation2 + $0x110] sm:$0xff]
    %v95 = vld [vmem:[#allocation2 + $0x118] sm:$0xff]
    %v96 = vld [vmem:[#allocation2 + $0x120] sm:$0xff]
    %v97 = vld [vmem:[#allocation2 + $0x128] sm:$0xff]
    %v98 = vld [vmem:[#allocation2 + $0x130] sm:$0xff]
    %v99 = vld [vmem:[#allocation2 + $0x138] sm:$0xff]
    %v100 = vld [vmem:[#allocation2 + $0x140] sm:$0xff]
    %v101 = vld [vmem:[#allocation2 + $0x148] sm:$0xff]
    %v102 = vld [vmem:[#allocation2 + $0x150] sm:$0xff]
    %v103 = vld [vmem:[#allocation2 + $0x158] sm:$0xff]
    %v104 = vld [vmem:[#allocation2 + $0x160] sm:$0xff]
    %v105 = vld [vmem:[#allocation2 + $0x168] sm:$0xff]
    %v106 = vld [vmem:[#allocation2 + $0x170] sm:$0xff]
    %v107 = vld [vmem:[#allocation2 + $0x178] sm:$0xff]
    %v108 = vld [vmem:[#allocation2 + $0x180] sm:$0xff]
    %v109 = vld [vmem:[#allocation2 + $0x188] sm:$0xff]
    %v110 = vld [vmem:[#allocation2 + $0x190] sm:$0xff]
    %v111 = vld [vmem:[#allocation2 + $0x198] sm:$0xff]
    %v112 = vld [vmem:[#allocation2 + $0x1a0] sm:$0xff]
    %v113 = vld [vmem:[#allocation2 + $0x1a8] sm:$0xff]
    %v114 = vld [vmem:[#allocation2 + $0x1b0] sm:$0xff]
    %v115 = vld [vmem:[#allocation2 + $0x1b8] sm:$0xff]
    %v116 = vld [vmem:[#allocation2 + $0x1c0] sm:$0xff]
    %v117 = vld [vmem:[#allocation2 + $0x1c8] sm:$0xff]
    %v118 = vld [vmem:[#allocation2 + $0x1d0] sm:$0xff]
    %v119 = vld [vmem:[#allocation2 + $0x1d8] sm:$0xff]
    %v120 = vld [vmem:[#allocation2 + $0x1e0] sm:$0xff]
    %v121 = vld [vmem:[#allocation2 + $0x1e8] sm:$0xff]
    %v122 = vld [vmem:[#allocation2 + $0x1f0] sm:$0xff]
    %v123 = vld [vmem:[#allocation2 + $0x1f8] sm:$0xff]
    %v124 = vld [vmem:[#allocation2 + $0x200] sm:$0xff]
    %v125 = vld [vmem:[#allocation2 + $0x208] sm:$0xff]
    %v126 = vld [vmem:[#allocation2 + $0x210] sm:$0xff]
    %v127 = vld [vmem:[#allocation2 + $0x218] sm:$0xff]
    %v128 = vld [vmem:[#allocation2 + $0x220] sm:$0xff]
    %v129 = vld [vmem:[#allocation2 + $0x228] sm:$0xff]
    %v130 = vld [vmem:[#allocation2 + $0x230] sm:$0xff]
    %v131 = vld [vmem:[#allocation2 + $0x238] sm:$0xff]
    %v132 = vld [vmem:[#allocation2 + $0x240] sm:$0xff]
    %v133 = vld [vmem:[#allocation2 + $0x248] sm:$0xff]
    %v134 = vld [vmem:[#allocation2 + $0x250] sm:$0xff]
    %v135 = vld [vmem:[#allocation2 + $0x258] sm:$0xff]
    %v136 = vld [vmem:[#allocation2 + $0x260] sm:$0xff]
    %v137 = vld [vmem:[#allocation2 + $0x268] sm:$0xff]
    %v138 = vld [vmem:[#allocation2 + $0x270] sm:$0xff]
    %v139 = vld [vmem:[#allocation2 + $0x278] sm:$0xff]
    %v140 = vld [vmem:[#allocation2 + $0x280] sm:$0xff]
    %v141 = vld [vmem:[#allocation2 + $0x288] sm:$0xff]
    %v142 = vld [vmem:[#allocation2 + $0x290] sm:$0xff]
    %v143 = vld [vmem:[#allocation2 + $0x298] sm:$0xff]
    %v144 = vld [vmem:[#allocation2 + $0x2a0] sm:$0xff]
    %v145 = vld [vmem:[#allocation2 + $0x2a8] sm:$0xff]
    %v146 = vld [vmem:[#allocation2 + $0x2b0] sm:$0xff]
    %v147 = vld [vmem:[#allocation2 + $0x2b8] sm:$0xff]
    %v148 = vld [vmem:[#allocation2 + $0x2c0] sm:$0xff]
    %v149 = vld [vmem:[#allocation2 + $0x2c8] sm:$0xff]
    %v150 = vld [vmem:[#allocation2 + $0x2d0] sm:$0xff]
    %v151 = vld [vmem:[#allocation2 + $0x2d8] sm:$0xff]
    %v152 = vld [vmem:[#allocation2 + $0x2e0] sm:$0xff]
    %v153 = vld [vmem:[#allocation2 + $0x2e8] sm:$0xff]
    %v154 = vld [vmem:[#allocation2 + $0x2f0] sm:$0xff]
    %v155 = vld [vmem:[#allocation2 + $0x2f8] sm:$0xff]
    %v156 = vld [vmem:[#allocation2 + $0x300] sm:$0xff]
    %v157 = vld [vmem:[#allocation2 + $0x308] sm:$0xff]
    %v158 = vld [vmem:[#allocation2 + $0x310] sm:$0xff]
    %v159 = vld [vmem:[#allocation2 + $0x318] sm:$0xff]
    %v160 = vld [vmem:[#allocation2 + $0x320] sm:$0xff]
    %v161 = vld [vmem:[#allocation2 + $0x328] sm:$0xff]
    %v162 = vld [vmem:[#allocation2 + $0x330] sm:$0xff]
    %v163 = vld [vmem:[#allocation2 + $0x338] sm:$0xff]
    %v164 = vld [vmem:[#allocation2 + $0x340] sm:$0xff]
    %v165 = vld [vmem:[#allocation2 + $0x348] sm:$0xff]
    %v166 = vld [vmem:[#allocation2 + $0x350] sm:$0xff]
    %v167 = vld [vmem:[#allocation2 + $0x358] sm:$0xff]
    %v168 = vld [vmem:[#allocation2 + $0x360] sm:$0xff]
    %v169 = vld [vmem:[#allocation2 + $0x368] sm:$0xff]
    %v170 = vld [vmem:[#allocation2 + $0x370] sm:$0xff]
    %v171 = vld [vmem:[#allocation2 + $0x378] sm:$0xff]
    %v172 = vld [vmem:[#allocation2 + $0x380] sm:$0xff]
    %v173 = vld [vmem:[#allocation2 + $0x388] sm:$0xff]
    %v174 = vld [vmem:[#allocation2 + $0x390] sm:$0xff]
    %v175 = vld [vmem:[#allocation2 + $0x398] sm:$0xff]
    %v176 = vld [vmem:[#allocation2 + $0x3a0] sm:$0xff]
    %v177 = vld [vmem:[#allocation2 + $0x3a8] sm:$0xff]
    %v178 = vld [vmem:[#allocation2 + $0x3b0] sm:$0xff]
    %v179 = vld [vmem:[#allocation2 + $0x3b8] sm:$0xff]
    %v180 = vld [vmem:[#allocation2 + $0x3c0] sm:$0xff]
    %v181 = vld [vmem:[#allocation2 + $0x3c8] sm:$0xff]
    %v182 = vld [vmem:[#allocation2 + $0x3d0] sm:$0xff]
    %v183 = vld [vmem:[#allocation2 + $0x3d8] sm:$0xff]
    %v184 = vld [vmem:[#allocation2 + $0x3e0] sm:$0xff]
    %v185 = vld [vmem:[#allocation2 + $0x3e8] sm:$0xff]
    %v186 = vld [vmem:[#allocation2 + $0x3f0] sm:$0xff]
    %v187 = vld [vmem:[#allocation2 + $0x3f8] sm:$0xff]
    %v188 = vld [vmem:[#allocation2 + $0x400] sm:$0xff]
    %v189 = vld [vmem:[#allocation2 + $0x408] sm:$0xff]
    %v190 = vld [vmem:[#allocation2 + $0x410] sm:$0xff]
    %v191 = vld [vmem:[#allocation2 + $0x418] sm:$0xff]
    %v192 = vld [vmem:[#allocation2 + $0x420] sm:$0xff]
    %v193 = vld [vmem:[#allocation2 + $0x428] sm:$0xff]
    %v194 = vld [vmem:[#allocation2 + $0x430] sm:$0xff]
    %v195 = vld [vmem:[#allocation2 + $0x438] sm:$0xff]
    %v196 = vld [vmem:[#allocation2 + $0x440] sm:$0xff]
    %v197 = vld [vmem:[#allocation2 + $0x448] sm:$0xff]
    %v198 = vld [vmem:[#allocation2 + $0x450] sm:$0xff]
    %v199 = vld [vmem:[#allocation2 + $0x458] sm:$0xff]
    %v200 = vld [vmem:[#allocation2 + $0x460] sm:$0xff]
    %v201 = vld [vmem:[#allocation2 + $0x468] sm:$0xff]
    %v202 = vld [vmem:[#allocation2 + $0x470] sm:$0xff]
    %v203 = vld [vmem:[#allocation2 + $0x478] sm:$0xff]
    %v204 = vld [vmem:[#allocation2 + $0x480] sm:$0xff]
    %v205 = vld [vmem:[#allocation2 + $0x488] sm:$0xff]
    %v206 = vld [vmem:[#allocation2 + $0x490] sm:$0xff]
    %v207 = vld [vmem:[#allocation2 + $0x498] sm:$0xff]
    %v208 = vld [vmem:[#allocation2 + $0x4a0] sm:$0xff]
    %v209 = vld [vmem:[#allocation2 + $0x4a8] sm:$0xff]
    %v210 = vld [vmem:[#allocation2 + $0x4b0] sm:$0xff]
    %v211 = vld [vmem:[#allocation2 + $0x4b8] sm:$0xff]
    %v212 = vld [vmem:[#allocation2 + $0x4c0] sm:$0xff]
    %v213 = vld [vmem:[#allocation2 + $0x4c8] sm:$0xff]
    %v214 = vld [vmem:[#allocation2 + $0x4d0] sm:$0xff]
    %v215 = vld [vmem:[#allocation2 + $0x4d8] sm:$0xff]
    %v216 = vld [vmem:[#allocation2 + $0x4e0] sm:$0xff]
    %v217 = vld [vmem:[#allocation2 + $0x4e8] sm:$0xff]
    %v218 = vld [vmem:[#allocation2 + $0x4f0] sm:$0xff]
    %v219 = vld [vmem:[#allocation2 + $0x4f8] sm:$0xff]
    %v220 = vld [vmem:[#allocation2 + $0x500] sm:$0xff]
    %v221 = vld [vmem:[#allocation2 + $0x508] sm:$0xff]
    %v222 = vld [vmem:[#allocation2 + $0x510] sm:$0xff]
    %v223 = vld [vmem:[#allocation2 + $0x518] sm:$0xff]
    %v224 = vld [vmem:[#allocation2 + $0x520] sm:$0xff]
    %v225 = vld [vmem:[#allocation2 + $0x528] sm:$0xff]
    %v226 = vld [vmem:[#allocation2 + $0x530] sm:$0xff]
    %v227 = vld [vmem:[#allocation2 + $0x538] sm:$0xff]
    %v228 = vld [vmem:[#allocation2 + $0x540] sm:$0xff]
    %v229 = vld [vmem:[#allocation2 + $0x548] sm:$0xff]
    %v230 = vld [vmem:[#allocation2 + $0x550] sm:$0xff]
    %v231 = vld [vmem:[#allocation2 + $0x558] sm:$0xff]
    %v232 = vld [vmem:[#allocation2 + $0x560] sm:$0xff]
    %v233 = vld [vmem:[#allocation2 + $0x568] sm:$0xff]
    %v234 = vld [vmem:[#allocation2 + $0x570] sm:$0xff]
    %v235 = vld [vmem:[#allocation2 + $0x578] sm:$0xff]
    %v236 = vld [vmem:[#allocation2 + $0x580] sm:$0xff]
    %v237 = vld [vmem:[#allocation2 + $0x588] sm:$0xff]
    %v238 = vld [vmem:[#allocation2 + $0x590] sm:$0xff]
    %v239 = vld [vmem:[#allocation2 + $0x598] sm:$0xff]
    %v240 = vld [vmem:[#allocation2 + $0x5a0] sm:$0xff]
    %v241 = vld [vmem:[#allocation2 + $0x5a8] sm:$0xff]
    %v242 = vld [vmem:[#allocation2 + $0x5b0] sm:$0xff]
    %v243 = vld [vmem:[#allocation2 + $0x5b8] sm:$0xff]
    %v244 = vld [vmem:[#allocation2 + $0x5c0] sm:$0xff]
    %v245 = vld [vmem:[#allocation2 + $0x5c8] sm:$0xff]
    %v246 = vld [vmem:[#allocation2 + $0x5d0] sm:$0xff]
    %v247 = vld [vmem:[#allocation2 + $0x5d8] sm:$0xff]
    %v248 = vld [vmem:[#allocation2 + $0x5e0] sm:$0xff]
    %v249 = vld [vmem:[#allocation2 + $0x5e8] sm:$0xff]
    %v250 = vld [vmem:[#allocation2 + $0x5f0] sm:$0xff]
    %v251 = vld [vmem:[#allocation2 + $0x5f8] sm:$0xff]
    %v252 = vld [vmem:[#allocation2 + $0x600] sm:$0xff]
    %v253 = vld [vmem:[#allocation2 + $0x608] sm:$0xff]
    %v254 = vld [vmem:[#allocation2 + $0x610] sm:$0xff]
    %v255 = vld [vmem:[#allocation2 + $0x618] sm:$0xff]
    %v256 = vld [vmem:[#allocation2 + $0x620] sm:$0xff]
    %v257 = vld [vmem:[#allocation2 + $0x628] sm:$0xff]
    %v258 = vld [vmem:[#allocation2 + $0x630] sm:$0xff]
    %v259 = vld [vmem:[#allocation2 + $0x638] sm:$0xff]
    %v260 = vld [vmem:[#allocation2 + $0x640] sm:$0xff]
    %v261 = vld [vmem:[#allocation2 + $0x648] sm:$0xff]
    %v262 = vld [vmem:[#allocation2 + $0x650] sm:$0xff]
    %v263 = vld [vmem:[#allocation2 + $0x658] sm:$0xff]
    %v264 = vld [vmem:[#allocation2 + $0x660] sm:$0xff]
    %v265 = vld [vmem:[#allocation2 + $0x668] sm:$0xff]
    %v266 = vld [vmem:[#allocation2 + $0x670] sm:$0xff]
    %v267 = vld [vmem:[#allocation2 + $0x678] sm:$0xff]
    %v268 = vld [vmem:[#allocation2 + $0x680] sm:$0xff]
    %v269 = vld [vmem:[#allocation2 + $0x688] sm:$0xff]
    %v270 = vld [vmem:[#allocation2 + $0x690] sm:$0xff]
    %v271 = vld [vmem:[#allocation2 + $0x698] sm:$0xff]
    %v272 = vld [vmem:[#allocation2 + $0x6a0] sm:$0xff]
    %v273 = vld [vmem:[#allocation2 + $0x6a8] sm:$0xff]
    %v274 = vld [vmem:[#allocation2 + $0x6b0] sm:$0xff]
    %v275 = vld [vmem:[#allocation2 + $0x6b8] sm:$0xff]
    %v276 = vld [vmem:[#allocation2 + $0x6c0] sm:$0xff]
    %v277 = vld [vmem:[#allocation2 + $0x6c8] sm:$0xff]
    %v278 = vld [vmem:[#allocation2 + $0x6d0] sm:$0xff]
    %v279 = vld [vmem:[#allocation2 + $0x6d8] sm:$0xff]
    %v280 = vld [vmem:[#allocation2 + $0x6e0] sm:$0xff]
    %v281 = vld [vmem:[#allocation2 + $0x6e8] sm:$0xff]
    %v282 = vld [vmem:[#allocation2 + $0x6f0] sm:$0xff]
    %v283 = vld [vmem:[#allocation2 + $0x6f8] sm:$0xff]
    %v284 = vld [vmem:[#allocation2 + $0x700] sm:$0xff]
    %v285 = vld [vmem:[#allocation2 + $0x708] sm:$0xff]
    %v286 = vld [vmem:[#allocation2 + $0x710] sm:$0xff]
    %v287 = vld [vmem:[#allocation2 + $0x718] sm:$0xff]
    %v288 = vld [vmem:[#allocation2 + $0x720] sm:$0xff]
    %v289 = vld [vmem:[#allocation2 + $0x728] sm:$0xff]
    %v290 = vld [vmem:[#allocation2 + $0x730] sm:$0xff]
    %v291 = vld [vmem:[#allocation2 + $0x738] sm:$0xff]
    %v292 = vld [vmem:[#allocation2 + $0x740] sm:$0xff]
    %v293 = vld [vmem:[#allocation2 + $0x748] sm:$0xff]
    %v294 = vld [vmem:[#allocation2 + $0x750] sm:$0xff]
    %v295 = vld [vmem:[#allocation2 + $0x758] sm:$0xff]
    %v296 = vld [vmem:[#allocation2 + $0x760] sm:$0xff]
    %v297 = vld [vmem:[#allocation2 + $0x768] sm:$0xff]
    %v298 = vld [vmem:[#allocation2 + $0x770] sm:$0xff]
    %v299 = vld [vmem:[#allocation2 + $0x778] sm:$0xff]
    %v300 = vld [vmem:[#allocation2 + $0x780] sm:$0xff]
    %v301 = vld [vmem:[#allocation2 + $0x788] sm:$0xff]
    %v302 = vld [vmem:[#allocation2 + $0x790] sm:$0xff]
    %v303 = vld [vmem:[#allocation2 + $0x798] sm:$0xff]
    %v304 = vld [vmem:[#allocation2 + $0x7a0] sm:$0xff]
    %v305 = vld [vmem:[#allocation2 + $0x7a8] sm:$0xff]
    %v306 = vld [vmem:[#allocation2 + $0x7b0] sm:$0xff]
    %v307 = vld [vmem:[#allocation2 + $0x7b8] sm:$0xff]
    %v308 = vld [vmem:[#allocation2 + $0x7c0] sm:$0xff]
    %v309 = vld [vmem:[#allocation2 + $0x7c8] sm:$0xff]
    %v310 = vld [vmem:[#allocation2 + $0x7d0] sm:$0xff]
    %v311 = vld [vmem:[#allocation2 + $0x7d8] sm:$0xff]
    %v312 = vld [vmem:[#allocation2 + $0x7e0] sm:$0xff]
    %v313 = vld [vmem:[#allocation2 + $0x7e8] sm:$0xff]
    %v314 = vld [vmem:[#allocation2 + $0x7f0] sm:$0xff]
    %v315 = vld [vmem:[#allocation2 + $0x7f8] sm:$0xff]
    %v316 = vld [vmem:[#allocation2 + $0x800] sm:$0xff]
    %v317 = vld [vmem:[#allocation2 + $0x808] sm:$0xff]
    %v318 = vld [vmem:[#allocation2 + $0x810] sm:$0xff]
    %v319 = vld [vmem:[#allocation2 + $0x818] sm:$0xff]
    %v320 = vld [vmem:[#allocation2 + $0x820] sm:$0xff]
    %v321 = vld [vmem:[#allocation2 + $0x828] sm:$0xff]
    %v322 = vld [vmem:[#allocation2 + $0x830] sm:$0xff]
    %v323 = vld [vmem:[#allocation2 + $0x838] sm:$0xff]
    %v324 = vld [vmem:[#allocation2 + $0x840] sm:$0xff]
    %v325 = vld [vmem:[#allocation2 + $0x848] sm:$0xff]
    %v326 = vld [vmem:[#allocation2 + $0x850] sm:$0xff]
    %v327 = vld [vmem:[#allocation2 + $0x858] sm:$0xff]
    %v328 = vld [vmem:[#allocation2 + $0x860] sm:$0xff]
    %v329 = vld [vmem:[#allocation2 + $0x868] sm:$0xff]
    %v330 = vld [vmem:[#allocation2 + $0x870] sm:$0xff]
    %v331 = vld [vmem:[#allocation2 + $0x878] sm:$0xff]
    %v332 = vld [vmem:[#allocation2 + $0x880] sm:$0xff]
    %v333 = vld [vmem:[#allocation2 + $0x888] sm:$0xff]
    %v334 = vld [vmem:[#allocation2 + $0x890] sm:$0xff]
    %v335 = vld [vmem:[#allocation2 + $0x898] sm:$0xff]
    %v336 = vld [vmem:[#allocation2 + $0x8a0] sm:$0xff]
    %v337 = vld [vmem:[#allocation2 + $0x8a8] sm:$0xff]
    %v338 = vld [vmem:[#allocation2 + $0x8b0] sm:$0xff]
    %v339 = vld [vmem:[#allocation2 + $0x8b8] sm:$0xff]
    %v340 = vld [vmem:[#allocation2 + $0x8c0] sm:$0xff]
    %v341 = vld [vmem:[#allocation2 + $0x8c8] sm:$0xff]
    %v342 = vld [vmem:[#allocation2 + $0x8d0] sm:$0xff]
    %v343 = vld [vmem:[#allocation2 + $0x8d8] sm:$0xff]
    %v344 = vld [vmem:[#allocation2 + $0x8e0] sm:$0xff]
    %v345 = vld [vmem:[#allocation2 + $0x8e8] sm:$0xff]
    %v346 = vld [vmem:[#allocation2 + $0x8f0] sm:$0xff]
    %v347 = vld [vmem:[#allocation2 + $0x8f8] sm:$0xff]
    %v348 = vld [vmem:[#allocation2 + $0x900] sm:$0xff]
    %v349 = vld [vmem:[#allocation2 + $0x908] sm:$0xff]
    %v350 = vld [vmem:[#allocation2 + $0x910] sm:$0xff]
    %v351 = vld [vmem:[#allocation2 + $0x918] sm:$0xff]
    %v352 = vld [vmem:[#allocation2 + $0x920] sm:$0xff]
    %v353 = vld [vmem:[#allocation2 + $0x928] sm:$0xff]
    %v354 = vld [vmem:[#allocation2 + $0x930] sm:$0xff]
    %v355 = vld [vmem:[#allocation2 + $0x938] sm:$0xff]
    %v356 = vld [vmem:[#allocation2 + $0x940] sm:$0xff]
    %v357 = vld [vmem:[#allocation2 + $0x948] sm:$0xff]
    %v358 = vld [vmem:[#allocation2 + $0x950] sm:$0xff]
    %v359 = vld [vmem:[#allocation2 + $0x958] sm:$0xff]
    %v360 = vld [vmem:[#allocation2 + $0x960] sm:$0xff]
    %v361 = vld [vmem:[#allocation2 + $0x968] sm:$0xff]
    %v362 = vld [vmem:[#allocation2 + $0x970] sm:$0xff]
    %v363 = vld [vmem:[#allocation2 + $0x978] sm:$0xff]
    %v364 = vld [vmem:[#allocation2 + $0x980] sm:$0xff]
    %v365 = vld [vmem:[#allocation2 + $0x988] sm:$0xff]
    %v366 = vld [vmem:[#allocation2 + $0x990] sm:$0xff]
    %v367 = vld [vmem:[#allocation2 + $0x998] sm:$0xff]
    %v368 = vld [vmem:[#allocation2 + $0x9a0] sm:$0xff]
    %v369 = vld [vmem:[#allocation2 + $0x9a8] sm:$0xff]
    %v370 = vld [vmem:[#allocation2 + $0x9b0] sm:$0xff]
    %v371 = vld [vmem:[#allocation2 + $0x9b8] sm:$0xff]
    %v372 = vld [vmem:[#allocation2 + $0x9c0] sm:$0xff]
    %v373 = vld [vmem:[#allocation2 + $0x9c8] sm:$0xff]
    %v374 = vld [vmem:[#allocation2 + $0x9d0] sm:$0xff]
    %v375 = vld [vmem:[#allocation2 + $0x9d8] sm:$0xff]
    %v376 = vld [vmem:[#allocation2 + $0x9e0] sm:$0xff]
    %v377 = vld [vmem:[#allocation2 + $0x9e8] sm:$0xff]
    %v378 = vld [vmem:[#allocation2 + $0x9f0] sm:$0xff]
    %v379 = vld [vmem:[#allocation2 + $0x9f8] sm:$0xff]
    %v380 = vld [vmem:[#allocation2 + $0xa00] sm:$0xff]
    %v381 = vld [vmem:[#allocation2 + $0xa08] sm:$0xff]
    %v382 = vld [vmem:[#allocation2 + $0xa10] sm:$0xff]
    %v383 = vld [vmem:[#allocation2 + $0xa18] sm:$0xff]
    %v384 = vld [vmem:[#allocation2 + $0xa20] sm:$0xff]
    %v385 = vld [vmem:[#allocation2 + $0xa28] sm:$0xff]
    %v386 = vld [vmem:[#allocation2 + $0xa30] sm:$0xff]
    %v387 = vld [vmem:[#allocation2 + $0xa38] sm:$0xff]
    %v388 = vld [vmem:[#allocation2 + $0xa40] sm:$0xff]
    %v389 = vld [vmem:[#allocation2 + $0xa48] sm:$0xff]
    %v390 = vld [vmem:[#allocation2 + $0xa50] sm:$0xff]
    %v391 = vld [vmem:[#allocation2 + $0xa58] sm:$0xff]
    %v392 = vld [vmem:[#allocation2 + $0xa60] sm:$0xff]
    %v393 = vld [vmem:[#allocation2 + $0xa68] sm:$0xff]
    %v394 = vld [vmem:[#allocation2 + $0xa70] sm:$0xff]
    %v395 = vld [vmem:[#allocation2 + $0xa78] sm:$0xff]
    %v396 = vld [vmem:[#allocation2 + $0xa80] sm:$0xff]
    %v397 = vld [vmem:[#allocation2 + $0xa88] sm:$0xff]
    %v398 = vld [vmem:[#allocation2 + $0xa90] sm:$0xff]
    %v399 = vld [vmem:[#allocation2 + $0xa98] sm:$0xff]
    %v400 = vld [vmem:[#allocation2 + $0xaa0] sm:$0xff]
    %v401 = vld [vmem:[#allocation2 + $0xaa8] sm:$0xff]
    %v402 = vld [vmem:[#allocation2 + $0xab0] sm:$0xff]
    %v403 = vld [vmem:[#allocation2 + $0xab8] sm:$0xff]
    %v404 = vld [vmem:[#allocation2 + $0xac0] sm:$0xff]
    %v405 = vld [vmem:[#allocation2 + $0xac8] sm:$0xff]
    %v406 = vld [vmem:[#allocation2 + $0xad0] sm:$0xff]
    %v407 = vld [vmem:[#allocation2 + $0xad8] sm:$0xff]
    %v408 = vld [vmem:[#allocation2 + $0xae0] sm:$0xff]
    %v409 = vld [vmem:[#allocation2 + $0xae8] sm:$0xff]
    %v410 = vld [vmem:[#allocation2 + $0xaf0] sm:$0xff]
    %v411 = vld [vmem:[#allocation2 + $0xaf8] sm:$0xff]
    %v412 = vld [vmem:[#allocation2 + $0xb00] sm:$0xff]
    %v413 = vld [vmem:[#allocation2 + $0xb08] sm:$0xff]
    %v414 = vld [vmem:[#allocation2 + $0xb10] sm:$0xff]
    %v415 = vld [vmem:[#allocation2 + $0xb18] sm:$0xff]
    %v416 = vld [vmem:[#allocation2 + $0xb20] sm:$0xff]
    %v417 = vld [vmem:[#allocation2 + $0xb28] sm:$0xff]
    %v418 = vld [vmem:[#allocation2 + $0xb30] sm:$0xff]
    %v419 = vld [vmem:[#allocation2 + $0xb38] sm:$0xff]
    %v420 = vld [vmem:[#allocation2 + $0xb40] sm:$0xff]
    %v421 = vld [vmem:[#allocation2 + $0xb48] sm:$0xff]
    %v422 = vld [vmem:[#allocation2 + $0xb50] sm:$0xff]
    %v423 = vld [vmem:[#allocation2 + $0xb58] sm:$0xff]
    %v424 = vld [vmem:[#allocation2 + $0xb60] sm:$0xff]
    %v425 = vld [vmem:[#allocation2 + $0xb68] sm:$0xff]
    %v426 = vld [vmem:[#allocation2 + $0xb70] sm:$0xff]
    %v427 = vld [vmem:[#allocation2 + $0xb78] sm:$0xff]
    %v428 = vld [vmem:[#allocation2 + $0xb80] sm:$0xff]
    %v429 = vld [vmem:[#allocation2 + $0xb88] sm:$0xff]
    %v430 = vld [vmem:[#allocation2 + $0xb90] sm:$0xff]
    %v431 = vld [vmem:[#allocation2 + $0xb98] sm:$0xff]
    %v432 = vld [vmem:[#allocation2 + $0xba0] sm:$0xff]
    %v433 = vld [vmem:[#allocation2 + $0xba8] sm:$0xff]
    %v434 = vld [vmem:[#allocation2 + $0xbb0] sm:$0xff]
    %v435 = vld [vmem:[#allocation2 + $0xbb8] sm:$0xff]
    %v436 = vld [vmem:[#allocation2 + $0xbc0] sm:$0xff]
    %v437 = vld [vmem:[#allocation2 + $0xbc8] sm:$0xff]
    %v438 = vld [vmem:[#allocation2 + $0xbd0] sm:$0xff]
    %v439 = vld [vmem:[#allocation2 + $0xbd8] sm:$0xff]
    %v440 = vld [vmem:[#allocation2 + $0xbe0] sm:$0xff]
    %v441 = vld [vmem:[#allocation2 + $0xbe8] sm:$0xff]
    %v442 = vld [vmem:[#allocation2 + $0xbf0] sm:$0xff]
    %v443 = vld [vmem:[#allocation2 + $0xbf8] sm:$0xff]
    %v444 = vld [vmem:[#allocation5] sm:$0x7]
    %v446 = vlaneseq
    %v447 = vshrl.u32 %v446, 7
    %v448 = vsub.s32 0, %v447
    %v449 = vrot.slane %v444, %v448
    %v450 = vlaneseq
    %v451 = vshrl.u32 %v450, 7
    %v452 = vsub.s32 1, %v451
    %v453 = vrot.slane %v444, %v452
    %v454 = vlaneseq
    %v455 = vshrl.u32 %v454, 7
    %v456 = vsub.s32 2, %v455
    %v457 = vrot.slane %v444, %v456
    %v463 = vcombine.high %v58, %v58
    %v465 = vunpack.c.l.s4 1983009808
    %v466 = vunpack.c.0.s8 %v465
    %v467 = vlaneseq
    %v468 = vshrl.u32 %v467, 7
    %v469 = vsub.s32 %v466, %v468
    %v470 = vrot.slane %v58, %v469
    %v472 = vunpack.c.l.s4 1983009808
    %v473 = vunpack.c.0.s8 %v472
    %v474 = vlaneseq
    %v475 = vshrl.u32 %v474, 7
    %v476 = vsub.s32 %v473, %v475
    %v477 = vrot.slane %v463, %v476
    %v478 = vcombine.high %v470, %v470
    %v479 = vcombine.high %v477, %v477
    %v480 = vcombine.high %v59, %v59
    %v482 = vunpack.c.l.s4 1983009808
    %v483 = vunpack.c.0.s8 %v482
    %v484 = vlaneseq
    %v485 = vshrl.u32 %v484, 7
    %v486 = vsub.s32 %v483, %v485
    %v487 = vrot.slane %v59, %v486
    %v489 = vunpack.c.l.s4 1983009808
    %v490 = vunpack.c.0.s8 %v489
    %v491 = vlaneseq
    %v492 = vshrl.u32 %v491, 7
    %v493 = vsub.s32 %v490, %v492
    %v494 = vrot.slane %v480, %v493
    %v495 = vcombine.high %v487, %v487
    %v496 = vcombine.high %v494, %v494
    %505 = vmatprep.subr.mxu0 %v61
    %506 = vmatpush1.msra.mxu0 %v60
    %507 = vmatprep.subr.mxu0 %v64
    %508 = vmatpush1.msra.mxu0 %v63
    %509 = vmatprep.subr.mxu0 %v67
    %510 = vmatpush1.msra.mxu0 %v66
    %511 = vmatprep.subr.mxu0 %v70
    %512 = vmatpush1.msra.mxu0 %v69
    %513 = vmatprep.subr.mxu0 %v73
    %514 = vmatpush1.msra.mxu0 %v72
    %515 = vmatprep.subr.mxu0 %v76
    %516 = vmatpush1.msra.mxu0 %v75
    %517 = vmatprep.subr.mxu0 %v79
    %518 = vmatpush1.msra.mxu0 %v78
    %519 = vmatprep.subr.mxu0 %v82
    %520 = vmatpush1.msra.mxu0 %v81
    %521 = vmatprep.subr.mxu0 %v85
    %522 = vmatpush1.msra.mxu0 %v84
    %523 = vmatprep.subr.mxu0 %v88
    %524 = vmatpush1.msra.mxu0 %v87
    %525 = vmatprep.subr.mxu0 %v91
    %526 = vmatpush1.msra.mxu0 %v90
    %527 = vmatprep.subr.mxu0 %v94
    %528 = vmatpush1.msra.mxu0 %v93
    %529 = vmatprep.subr.mxu0 %v97
    %530 = vmatpush1.msra.mxu0 %v96
    %531 = vmatprep.subr.mxu0 %v100
    %532 = vmatpush1.msra.mxu0 %v99
    %533 = vmatprep.subr.mxu0 %v103
    %534 = vmatpush1.msra.mxu0 %v102
    %535 = vmatprep.subr.mxu0 %v106
    %536 = vmatpush1.msra.mxu0 %v105
    %537 = vmatprep.subr.mxu0 %v109
    %538 = vmatpush1.msra.mxu0 %v108
    %539 = vmatprep.subr.mxu0 %v112
    %540 = vmatpush1.msra.mxu0 %v111
    %541 = vmatprep.subr.mxu0 %v115
    %542 = vmatpush1.msra.mxu0 %v114
    %543 = vmatprep.subr.mxu0 %v118
    %544 = vmatpush1.msra.mxu0 %v117
    %545 = vmatprep.subr.mxu0 %v121
    %546 = vmatpush1.msra.mxu0 %v120
    %547 = vmatprep.subr.mxu0 %v124
    %548 = vmatpush1.msra.mxu0 %v123
    %549 = vmatprep.subr.mxu0 %v127
    %550 = vmatpush1.msra.mxu0 %v126
    %551 = vmatprep.subr.mxu0 %v130
    %552 = vmatpush1.msra.mxu0 %v129
    %553 = vmatprep.subr.mxu0 %v133
    %554 = vmatpush1.msra.mxu0 %v132
    %555 = vmatprep.subr.mxu0 %v136
    %556 = vmatpush1.msra.mxu0 %v135
    %557 = vmatprep.subr.mxu0 %v139
    %558 = vmatpush1.msra.mxu0 %v138
    %559 = vmatprep.subr.mxu0 %v142
    %560 = vmatpush1.msra.mxu0 %v141
    %561 = vmatprep.subr.mxu0 %v145
    %562 = vmatpush1.msra.mxu0 %v144
    %563 = vmatprep.subr.mxu0 %v148
    %564 = vmatpush1.msra.mxu0 %v147
    %565 = vmatprep.subr.mxu0 %v151
    %566 = vmatpush1.msra.mxu0 %v150
    %567 = vmatprep.subr.mxu0 %v154
    %568 = vmatpush1.msra.mxu0 %v153
    %569 = vmatprep.mubr.f32.mxu0 %v478
    %570 = vmatmul.mubr.f32.gmra.mrb[0].mxu0 %v470
    %v571 = vpop.f32.mrb[0].mxu0
    %v572 = vadd.f32 %v449, %v571
    %v573 = vpop.f32.mrb[0].mxu0
    %v574 = vadd.f32 %v453, %v573
    %575 = vdwg.mxu0
    %576 = vmatprep.subr.mxu0 %v157
    %577 = vmatpush1.msra.mxu0 %v156
    %578 = vmatprep.subr.mxu0 %v160
    %579 = vmatpush1.msra.mxu0 %v159
    %580 = vmatprep.subr.mxu0 %v163
    %581 = vmatpush1.msra.mxu0 %v162
    %582 = vmatprep.subr.mxu0 %v166
    %583 = vmatpush1.msra.mxu0 %v165
    %584 = vmatprep.subr.mxu0 %v169
    %585 = vmatpush1.msra.mxu0 %v168
    %586 = vmatprep.subr.mxu0 %v172
    %587 = vmatpush1.msra.mxu0 %v171
    %588 = vmatprep.subr.mxu0 %v175
    %589 = vmatpush1.msra.mxu0 %v174
    %590 = vmatprep.subr.mxu0 %v178
    %591 = vmatpush1.msra.mxu0 %v177
    %592 = vmatprep.subr.mxu0 %v181
    %593 = vmatpush1.msra.mxu0 %v180
    %594 = vmatprep.subr.mxu0 %v184
    %595 = vmatpush1.msra.mxu0 %v183
    %596 = vmatprep.subr.mxu0 %v187
    %597 = vmatpush1.msra.mxu0 %v186
    %598 = vmatprep.subr.mxu0 %v190
    %599 = vmatpush1.msra.mxu0 %v189
    %600 = vmatprep.subr.mxu0 %v193
    %601 = vmatpush1.msra.mxu0 %v192
    %602 = vmatprep.subr.mxu0 %v196
    %603 = vmatpush1.msra.mxu0 %v195
    %604 = vmatprep.subr.mxu0 %v199
    %605 = vmatpush1.msra.mxu0 %v198
    %606 = vmatprep.subr.mxu0 %v202
    %607 = vmatpush1.msra.mxu0 %v201
    %608 = vmatprep.subr.mxu0 %v205
    %609 = vmatpush1.msra.mxu0 %v204
    %610 = vmatprep.subr.mxu0 %v208
    %611 = vmatpush1.msra.mxu0 %v207
    %612 = vmatprep.subr.mxu0 %v211
    %613 = vmatpush1.msra.mxu0 %v210
    %614 = vmatprep.subr.mxu0 %v214
    %615 = vmatpush1.msra.mxu0 %v213
    %616 = vmatprep.subr.mxu0 %v217
    %617 = vmatpush1.msra.mxu0 %v216
    %618 = vmatprep.subr.mxu0 %v220
    %619 = vmatpush1.msra.mxu0 %v219
    %620 = vmatprep.subr.mxu0 %v223
    %621 = vmatpush1.msra.mxu0 %v222
    %622 = vmatprep.subr.mxu0 %v226
    %623 = vmatpush1.msra.mxu0 %v225
    %624 = vmatprep.subr.mxu0 %v229
    %625 = vmatpush1.msra.mxu0 %v228
    %626 = vmatprep.subr.mxu0 %v232
    %627 = vmatpush1.msra.mxu0 %v231
    %628 = vmatprep.subr.mxu0 %v235
    %629 = vmatpush1.msra.mxu0 %v234
    %630 = vmatprep.subr.mxu0 %v238
    %631 = vmatpush1.msra.mxu0 %v237
    %632 = vmatprep.subr.mxu0 %v241
    %633 = vmatpush1.msra.mxu0 %v240
    %634 = vmatprep.subr.mxu0 %v244
    %635 = vmatpush1.msra.mxu0 %v243
    %636 = vmatprep.subr.mxu0 %v247
    %637 = vmatpush1.msra.mxu0 %v246
    %638 = vmatprep.subr.mxu0 %v250
    %639 = vmatpush1.msra.mxu0 %v249
    %640 = vmatprep.mubr.f32.mxu0 %v479
    %641 = vmatmul.mubr.f32.gmra.mrb[0].mxu0 %v477
    %v642 = vpop.f32.mrb[0].mxu0
    %v643 = vadd.f32 %v572, %v642
    %v644 = vpop.f32.mrb[0].mxu0
    %v645 = vadd.f32 %v574, %v644
    %646 = vdwg.mxu0
    %647 = vmatprep.subr.mxu0 %v253
    %648 = vmatpush1.msra.mxu0 %v252
    %649 = vmatprep.subr.mxu0 %v256
    %650 = vmatpush1.msra.mxu0 %v255
    %651 = vmatprep.subr.mxu0 %v259
    %652 = vmatpush1.msra.mxu0 %v258
    %653 = vmatprep.subr.mxu0 %v262
    %654 = vmatpush1.msra.mxu0 %v261
    %655 = vmatprep.subr.mxu0 %v265
    %656 = vmatpush1.msra.mxu0 %v264
    %657 = vmatprep.subr.mxu0 %v268
    %658 = vmatpush1.msra.mxu0 %v267
    %659 = vmatprep.subr.mxu0 %v271
    %660 = vmatpush1.msra.mxu0 %v270
    %661 = vmatprep.subr.mxu0 %v274
    %662 = vmatpush1.msra.mxu0 %v273
    %663 = vmatprep.subr.mxu0 %v277
    %664 = vmatpush1.msra.mxu0 %v276
    %665 = vmatprep.subr.mxu0 %v280
    %666 = vmatpush1.msra.mxu0 %v279
    %667 = vmatprep.subr.mxu0 %v283
    %668 = vmatpush1.msra.mxu0 %v282
    %669 = vmatprep.subr.mxu0 %v286
    %670 = vmatpush1.msra.mxu0 %v285
    %671 = vmatprep.subr.mxu0 %v289
    %672 = vmatpush1.msra.mxu0 %v288
    %673 = vmatprep.subr.mxu0 %v292
    %674 = vmatpush1.msra.mxu0 %v291
    %675 = vmatprep.subr.mxu0 %v295
    %676 = vmatpush1.msra.mxu0 %v294
    %677 = vmatprep.subr.mxu0 %v298
    %678 = vmatpush1.msra.mxu0 %v297
    %679 = vmatprep.subr.mxu0 %v301
    %680 = vmatpush1.msra.mxu0 %v300
    %681 = vmatprep.subr.mxu0 %v304
    %682 = vmatpush1.msra.mxu0 %v303
    %683 = vmatprep.subr.mxu0 %v307
    %684 = vmatpush1.msra.mxu0 %v306
    %685 = vmatprep.subr.mxu0 %v310
    %686 = vmatpush1.msra.mxu0 %v309
    %687 = vmatprep.subr.mxu0 %v313
    %688 = vmatpush1.msra.mxu0 %v312
    %689 = vmatprep.subr.mxu0 %v316
    %690 = vmatpush1.msra.mxu0 %v315
    %691 = vmatprep.subr.mxu0 %v319
    %692 = vmatpush1.msra.mxu0 %v318
    %693 = vmatprep.subr.mxu0 %v322
    %694 = vmatpush1.msra.mxu0 %v321
    %695 = vmatprep.subr.mxu0 %v325
    %696 = vmatpush1.msra.mxu0 %v324
    %697 = vmatprep.subr.mxu0 %v328
    %698 = vmatpush1.msra.mxu0 %v327
    %699 = vmatprep.subr.mxu0 %v331
    %700 = vmatpush1.msra.mxu0 %v330
    %701 = vmatprep.subr.mxu0 %v334
    %702 = vmatpush1.msra.mxu0 %v333
    %703 = vmatprep.subr.mxu0 %v337
    %704 = vmatpush1.msra.mxu0 %v336
    %705 = vmatprep.subr.mxu0 %v340
    %706 = vmatpush1.msra.mxu0 %v339
    %707 = vmatprep.subr.mxu0 %v343
    %708 = vmatpush1.msra.mxu0 %v342
    %709 = vmatprep.subr.mxu0 %v346
    %710 = vmatpush1.msra.mxu0 %v345
    %711 = vmatprep.mubr.f32.mxu0 %v495
    %712 = vmatmul.mubr.f32.gmra.mrb[0].mxu0 %v487
    %v713 = vpop.f32.mrb[0].mxu0
    %v714 = vadd.f32 %v643, %v713
    %v715 = vpop.f32.mrb[0].mxu0
    %v716 = vadd.f32 %v645, %v715
    %717 = vdwg.mxu0
    %718 = vmatprep.subr.mxu0 %v349
    %719 = vmatpush1.msra.mxu0 %v348
    %720 = vmatprep.subr.mxu0 %v352
    %721 = vmatpush1.msra.mxu0 %v351
    %722 = vmatprep.subr.mxu0 %v355
    %723 = vmatpush1.msra.mxu0 %v354
    %724 = vmatprep.subr.mxu0 %v358
    %725 = vmatpush1.msra.mxu0 %v357
    %726 = vmatprep.subr.mxu0 %v361
    %727 = vmatpush1.msra.mxu0 %v360
    %728 = vmatprep.subr.mxu0 %v364
    %729 = vmatpush1.msra.mxu0 %v363
    %730 = vmatprep.subr.mxu0 %v367
    %731 = vmatpush1.msra.mxu0 %v366
    %732 = vmatprep.subr.mxu0 %v370
    %733 = vmatpush1.msra.mxu0 %v369
    %734 = vmatprep.subr.mxu0 %v373
    %735 = vmatpush1.msra.mxu0 %v372
    %736 = vmatprep.subr.mxu0 %v376
    %737 = vmatpush1.msra.mxu0 %v375
    %738 = vmatprep.subr.mxu0 %v379
    %739 = vmatpush1.msra.mxu0 %v378
    %740 = vmatprep.subr.mxu0 %v382
    %741 = vmatpush1.msra.mxu0 %v381
    %742 = vmatprep.subr.mxu0 %v385
    %743 = vmatpush1.msra.mxu0 %v384
    %744 = vmatprep.subr.mxu0 %v388
    %745 = vmatpush1.msra.mxu0 %v387
    %746 = vmatprep.subr.mxu0 %v391
    %747 = vmatpush1.msra.mxu0 %v390
    %748 = vmatprep.subr.mxu0 %v394
    %749 = vmatpush1.msra.mxu0 %v393
    %750 = vmatprep.subr.mxu0 %v397
    %751 = vmatpush1.msra.mxu0 %v396
    %752 = vmatprep.subr.mxu0 %v400
    %753 = vmatpush1.msra.mxu0 %v399
    %754 = vmatprep.subr.mxu0 %v403
    %755 = vmatpush1.msra.mxu0 %v402
    %756 = vmatprep.subr.mxu0 %v406
    %757 = vmatpush1.msra.mxu0 %v405
    %758 = vmatprep.subr.mxu0 %v409
    %759 = vmatpush1.msra.mxu0 %v408
    %760 = vmatprep.subr.mxu0 %v412
    %761 = vmatpush1.msra.mxu0 %v411
    %762 = vmatprep.subr.mxu0 %v415
    %763 = vmatpush1.msra.mxu0 %v414
    %764 = vmatprep.subr.mxu0 %v418
    %765 = vmatpush1.msra.mxu0 %v417
    %766 = vmatprep.subr.mxu0 %v421
    %767 = vmatpush1.msra.mxu0 %v420
    %768 = vmatprep.subr.mxu0 %v424
    %769 = vmatpush1.msra.mxu0 %v423
    %770 = vmatprep.subr.mxu0 %v427
    %771 = vmatpush1.msra.mxu0 %v426
    %772 = vmatprep.subr.mxu0 %v430
    %773 = vmatpush1.msra.mxu0 %v429
    %774 = vmatprep.subr.mxu0 %v433
    %775 = vmatpush1.msra.mxu0 %v432
    %776 = vmatprep.subr.mxu0 %v436
    %777 = vmatpush1.msra.mxu0 %v435
    %778 = vmatprep.subr.mxu0 %v439
    %779 = vmatpush1.msra.mxu0 %v438
    %780 = vmatprep.subr.mxu0 %v442
    %781 = vmatpush1.msra.mxu0 %v441
    %782 = vmatprep.mubr.f32.mxu0 %v496
    %783 = vmatmul.mubr.f32.gmra.mrb[0].mxu0 %v494
    %v784 = vpop.f32.mrb[0].mxu0
    %v785 = vadd.f32 %v714, %v784
    %v786 = vpop.f32.mrb[0].mxu0
    %v787 = vadd.f32 %v716, %v786
    %788 = vdwg.mxu0
    %789 = vmatprep.subr.mxu0 0.0
    %790 = vmatpush1.msra.mxu0 %v62
    %791 = vmatprep.subr.mxu0 0.0
    %792 = vmatpush1.msra.mxu0 %v65
    %793 = vmatprep.subr.mxu0 0.0
    %794 = vmatpush1.msra.mxu0 %v68
    %795 = vmatprep.subr.mxu0 0.0
    %796 = vmatpush1.msra.mxu0 %v71
    %797 = vmatprep.subr.mxu0 0.0
    %798 = vmatpush1.msra.mxu0 %v74
    %799 = vmatprep.subr.mxu0 0.0
    %800 = vmatpush1.msra.mxu0 %v77
    %801 = vmatprep.subr.mxu0 0.0
    %802 = vmatpush1.msra.mxu0 %v80
    %803 = vmatprep.subr.mxu0 0.0
    %804 = vmatpush1.msra.mxu0 %v83
    %805 = vmatprep.subr.mxu0 0.0
    %806 = vmatpush1.msra.mxu0 %v86
    %807 = vmatprep.subr.mxu0 0.0
    %808 = vmatpush1.msra.mxu0 %v89
    %809 = vmatprep.subr.mxu0 0.0
    %810 = vmatpush1.msra.mxu0 %v92
    %811 = vmatprep.subr.mxu0 0.0
    %812 = vmatpush1.msra.mxu0 %v95
    %813 = vmatprep.subr.mxu0 0.0
    %814 = vmatpush1.msra.mxu0 %v98
    %815 = vmatprep.subr.mxu0 0.0
    %816 = vmatpush1.msra.mxu0 %v101
    %817 = vmatprep.subr.mxu0 0.0
    %818 = vmatpush1.msra.mxu0 %v104
    %819 = vmatprep.subr.mxu0 0.0
    %820 = vmatpush1.msra.mxu0 %v107
    %821 = vmatprep.subr.mxu0 0.0
    %822 = vmatpush1.msra.mxu0 %v110
    %823 = vmatprep.subr.mxu0 0.0
    %824 = vmatpush1.msra.mxu0 %v113
    %825 = vmatprep.subr.mxu0 0.0
    %826 = vmatpush1.msra.mxu0 %v116
    %827 = vmatprep.subr.mxu0 0.0
    %828 = vmatpush1.msra.mxu0 %v119
    %829 = vmatprep.subr.mxu0 0.0
    %830 = vmatpush1.msra.mxu0 %v122
    %831 = vmatprep.subr.mxu0 0.0
    %832 = vmatpush1.msra.mxu0 %v125
    %833 = vmatprep.subr.mxu0 0.0
    %834 = vmatpush1.msra.mxu0 %v128
    %835 = vmatprep.subr.mxu0 0.0
    %836 = vmatpush1.msra.mxu0 %v131
    %837 = vmatprep.subr.mxu0 0.0
    %838 = vmatpush1.msra.mxu0 %v134
    %839 = vmatprep.subr.mxu0 0.0
    %840 = vmatpush1.msra.mxu0 %v137
    %841 = vmatprep.subr.mxu0 0.0
    %842 = vmatpush1.msra.mxu0 %v140
    %843 = vmatprep.subr.mxu0 0.0
    %844 = vmatpush1.msra.mxu0 %v143
    %845 = vmatprep.subr.mxu0 0.0
    %846 = vmatpush1.msra.mxu0 %v146
    %847 = vmatprep.subr.mxu0 0.0
    %848 = vmatpush1.msra.mxu0 %v149
    %849 = vmatprep.subr.mxu0 0.0
    %850 = vmatpush1.msra.mxu0 %v152
    %851 = vmatprep.subr.mxu0 0.0
    %852 = vmatpush1.msra.mxu0 %v155
    %853 = vmatprep.mubr.f32.mxu0 %v478
    %854 = vmatmul.mubr.f32.gmra.mrb[0].mxu0 %v470
    %v855 = vpop.f32.mrb[0].mxu0
    %v856 = vadd.f32 %v457, %v855
    %v857 = vpop.f32.mrb[0].mxu0
    %858 = vdwg.mxu0
    %859 = vmatprep.subr.mxu0 0.0
    %860 = vmatpush1.msra.mxu0 %v158
    %861 = vmatprep.subr.mxu0 0.0
    %862 = vmatpush1.msra.mxu0 %v161
    %863 = vmatprep.subr.mxu0 0.0
    %864 = vmatpush1.msra.mxu0 %v164
    %865 = vmatprep.subr.mxu0 0.0
    %866 = vmatpush1.msra.mxu0 %v167
    %867 = vmatprep.subr.mxu0 0.0
    %868 = vmatpush1.msra.mxu0 %v170
    %869 = vmatprep.subr.mxu0 0.0
    %870 = vmatpush1.msra.mxu0 %v173
    %871 = vmatprep.subr.mxu0 0.0
    %872 = vmatpush1.msra.mxu0 %v176
    %873 = vmatprep.subr.mxu0 0.0
    %874 = vmatpush1.msra.mxu0 %v179
    %875 = vmatprep.subr.mxu0 0.0
    %876 = vmatpush1.msra.mxu0 %v182
    %877 = vmatprep.subr.mxu0 0.0
    %878 = vmatpush1.msra.mxu0 %v185
    %879 = vmatprep.subr.mxu0 0.0
    %880 = vmatpush1.msra.mxu0 %v188
    %881 = vmatprep.subr.mxu0 0.0
    %882 = vmatpush1.msra.mxu0 %v191
    %883 = vmatprep.subr.mxu0 0.0
    %884 = vmatpush1.msra.mxu0 %v194
    %885 = vmatprep.subr.mxu0 0.0
    %886 = vmatpush1.msra.mxu0 %v197
    %887 = vmatprep.subr.mxu0 0.0
    %888 = vmatpush1.msra.mxu0 %v200
    %889 = vmatprep.subr.mxu0 0.0
    %890 = vmatpush1.msra.mxu0 %v203
    %891 = vmatprep.subr.mxu0 0.0
    %892 = vmatpush1.msra.mxu0 %v206
    %893 = vmatprep.subr.mxu0 0.0
    %894 = vmatpush1.msra.mxu0 %v209
    %895 = vmatprep.subr.mxu0 0.0
    %896 = vmatpush1.msra.mxu0 %v212
    %897 = vmatprep.subr.mxu0 0.0
    %898 = vmatpush1.msra.mxu0 %v215
    %899 = vmatprep.subr.mxu0 0.0
    %900 = vmatpush1.msra.mxu0 %v218
    %901 = vmatprep.subr.mxu0 0.0
    %902 = vmatpush1.msra.mxu0 %v221
    %903 = vmatprep.subr.mxu0 0.0
    %904 = vmatpush1.msra.mxu0 %v224
    %905 = vmatprep.subr.mxu0 0.0
    %906 = vmatpush1.msra.mxu0 %v227
    %907 = vmatprep.subr.mxu0 0.0
    %908 = vmatpush1.msra.mxu0 %v230
    %909 = vmatprep.subr.mxu0 0.0
    %910 = vmatpush1.msra.mxu0 %v233
    %911 = vmatprep.subr.mxu0 0.0
    %912 = vmatpush1.msra.mxu0 %v236
    %913 = vmatprep.subr.mxu0 0.0
    %914 = vmatpush1.msra.mxu0 %v239
    %915 = vmatprep.subr.mxu0 0.0
    %916 = vmatpush1.msra.mxu0 %v242
    %917 = vmatprep.subr.mxu0 0.0
    %918 = vmatpush1.msra.mxu0 %v245
    %919 = vmatprep.subr.mxu0 0.0
    %920 = vmatpush1.msra.mxu0 %v248
    %921 = vmatprep.subr.mxu0 0.0
    %922 = vmatpush1.msra.mxu0 %v251
    %923 = vmatprep.mubr.f32.mxu0 %v479
    %924 = vmatmul.mubr.f32.gmra.mrb[0].mxu0 %v477
    %v925 = vpop.f32.mrb[0].mxu0
    %v926 = vadd.f32 %v856, %v925
    %v927 = vpop.f32.mrb[0].mxu0
    %928 = vdwg.mxu0
    %929 = vmatprep.subr.mxu0 0.0
    %930 = vmatpush1.msra.mxu0 %v254
    %931 = vmatprep.subr.mxu0 0.0
    %932 = vmatpush1.msra.mxu0 %v257
    %933 = vmatprep.subr.mxu0 0.0
    %934 = vmatpush1.msra.mxu0 %v260
    %935 = vmatprep.subr.mxu0 0.0
    %936 = vmatpush1.msra.mxu0 %v263
    %937 = vmatprep.subr.mxu0 0.0
    %938 = vmatpush1.msra.mxu0 %v266
    %939 = vmatprep.subr.mxu0 0.0
    %940 = vmatpush1.msra.mxu0 %v269
    %941 = vmatprep.subr.mxu0 0.0
    %942 = vmatpush1.msra.mxu0 %v272
    %943 = vmatprep.subr.mxu0 0.0
    %944 = vmatpush1.msra.mxu0 %v275
    %945 = vmatprep.subr.mxu0 0.0
    %946 = vmatpush1.msra.mxu0 %v278
    %947 = vmatprep.subr.mxu0 0.0
    %948 = vmatpush1.msra.mxu0 %v281
    %949 = vmatprep.subr.mxu0 0.0
    %950 = vmatpush1.msra.mxu0 %v284
    %951 = vmatprep.subr.mxu0 0.0
    %952 = vmatpush1.msra.mxu0 %v287
    %953 = vmatprep.subr.mxu0 0.0
    %954 = vmatpush1.msra.mxu0 %v290
    %955 = vmatprep.subr.mxu0 0.0
    %956 = vmatpush1.msra.mxu0 %v293
    %957 = vmatprep.subr.mxu0 0.0
    %958 = vmatpush1.msra.mxu0 %v296
    %959 = vmatprep.subr.mxu0 0.0
    %960 = vmatpush1.msra.mxu0 %v299
    %961 = vmatprep.subr.mxu0 0.0
    %962 = vmatpush1.msra.mxu0 %v302
    %963 = vmatprep.subr.mxu0 0.0
    %964 = vmatpush1.msra.mxu0 %v305
    %965 = vmatprep.subr.mxu0 0.0
    %966 = vmatpush1.msra.mxu0 %v308
    %967 = vmatprep.subr.mxu0 0.0
    %968 = vmatpush1.msra.mxu0 %v311
    %969 = vmatprep.subr.mxu0 0.0
    %970 = vmatpush1.msra.mxu0 %v314
    %971 = vmatprep.subr.mxu0 0.0
    %972 = vmatpush1.msra.mxu0 %v317
    %973 = vmatprep.subr.mxu0 0.0
    %974 = vmatpush1.msra.mxu0 %v320
    %975 = vmatprep.subr.mxu0 0.0
    %976 = vmatpush1.msra.mxu0 %v323
    %977 = vmatprep.subr.mxu0 0.0
    %978 = vmatpush1.msra.mxu0 %v326
    %979 = vmatprep.subr.mxu0 0.0
    %980 = vmatpush1.msra.mxu0 %v329
    %981 = vmatprep.subr.mxu0 0.0
    %982 = vmatpush1.msra.mxu0 %v332
    %983 = vmatprep.subr.mxu0 0.0
    %984 = vmatpush1.msra.mxu0 %v335
    %985 = vmatprep.subr.mxu0 0.0
    %986 = vmatpush1.msra.mxu0 %v338
    %987 = vmatprep.subr.mxu0 0.0
    %988 = vmatpush1.msra.mxu0 %v341
    %989 = vmatprep.subr.mxu0 0.0
    %990 = vmatpush1.msra.mxu0 %v344
    %991 = vmatprep.subr.mxu0 0.0
    %992 = vmatpush1.msra.mxu0 %v347
    %993 = vmatprep.mubr.f32.mxu0 %v495
    %994 = vmatmul.mubr.f32.gmra.mrb[0].mxu0 %v487
    %v995 = vpop.f32.mrb[0].mxu0
    %v996 = vadd.f32 %v926, %v995
    %v997 = vpop.f32.mrb[0].mxu0
    %998 = vdwg.mxu0
    %999 = vmatprep.subr.mxu0 0.0
    %1000 = vmatpush1.msra.mxu0 %v350
    %1001 = vmatprep.subr.mxu0 0.0
    %1002 = vmatpush1.msra.mxu0 %v353
    %1003 = vmatprep.subr.mxu0 0.0
    %1004 = vmatpush1.msra.mxu0 %v356
    %1005 = vmatprep.subr.mxu0 0.0
    %1006 = vmatpush1.msra.mxu0 %v359
    %1007 = vmatprep.subr.mxu0 0.0
    %1008 = vmatpush1.msra.mxu0 %v362
    %1009 = vmatprep.subr.mxu0 0.0
    %1010 = vmatpush1.msra.mxu0 %v365
    %1011 = vmatprep.subr.mxu0 0.0
    %1012 = vmatpush1.msra.mxu0 %v368
    %1013 = vmatprep.subr.mxu0 0.0
    %1014 = vmatpush1.msra.mxu0 %v371
    %1015 = vmatprep.subr.mxu0 0.0
    %1016 = vmatpush1.msra.mxu0 %v374
    %1017 = vmatprep.subr.mxu0 0.0
    %1018 = vmatpush1.msra.mxu0 %v377
    %1019 = vmatprep.subr.mxu0 0.0
    %1020 = vmatpush1.msra.mxu0 %v380
    %1021 = vmatprep.subr.mxu0 0.0
    %1022 = vmatpush1.msra.mxu0 %v383
    %1023 = vmatprep.subr.mxu0 0.0
    %1024 = vmatpush1.msra.mxu0 %v386
    %1025 = vmatprep.subr.mxu0 0.0
    %1026 = vmatpush1.msra.mxu0 %v389
    %1027 = vmatprep.subr.mxu0 0.0
    %1028 = vmatpush1.msra.mxu0 %v392
    %1029 = vmatprep.subr.mxu0 0.0
    %1030 = vmatpush1.msra.mxu0 %v395
    %1031 = vmatprep.subr.mxu0 0.0
    %1032 = vmatpush1.msra.mxu0 %v398
    %1033 = vmatprep.subr.mxu0 0.0
    %1034 = vmatpush1.msra.mxu0 %v401
    %1035 = vmatprep.subr.mxu0 0.0
    %1036 = vmatpush1.msra.mxu0 %v404
    %1037 = vmatprep.subr.mxu0 0.0
    %1038 = vmatpush1.msra.mxu0 %v407
    %1039 = vmatprep.subr.mxu0 0.0
    %1040 = vmatpush1.msra.mxu0 %v410
    %1041 = vmatprep.subr.mxu0 0.0
    %1042 = vmatpush1.msra.mxu0 %v413
    %1043 = vmatprep.subr.mxu0 0.0
    %1044 = vmatpush1.msra.mxu0 %v416
    %1045 = vmatprep.subr.mxu0 0.0
    %1046 = vmatpush1.msra.mxu0 %v419
    %1047 = vmatprep.subr.mxu0 0.0
    %1048 = vmatpush1.msra.mxu0 %v422
    %1049 = vmatprep.subr.mxu0 0.0
    %1050 = vmatpush1.msra.mxu0 %v425
    %1051 = vmatprep.subr.mxu0 0.0
    %1052 = vmatpush1.msra.mxu0 %v428
    %1053 = vmatprep.subr.mxu0 0.0
    %1054 = vmatpush1.msra.mxu0 %v431
    %1055 = vmatprep.subr.mxu0 0.0
    %1056 = vmatpush1.msra.mxu0 %v434
    %1057 = vmatprep.subr.mxu0 0.0
    %1058 = vmatpush1.msra.mxu0 %v437
    %1059 = vmatprep.subr.mxu0 0.0
    %1060 = vmatpush1.msra.mxu0 %v440
    %1061 = vmatprep.subr.mxu0 0.0
    %1062 = vmatpush1.msra.mxu0 %v443
    %1063 = vmatprep.mubr.f32.mxu0 %v496
    %1064 = vmatmul.mubr.f32.gmra.mrb[0].mxu0 %v494
    %v1065 = vpop.f32.mrb[0].mxu0
    %v1066 = vadd.f32 %v996, %v1065
    %v1067 = vpop.f32.mrb[0].mxu0
    %1068 = vdwg.mxu0
    %v1069 = vmax.f32 %v785, 0.0
    %v1070 = vmax.f32 %v787, 0.0
    %v1071 = vmax.f32 %v1066, 0.0
    %v1072 = vld [vmem:[%s3] sm:$0xff]
    %v1073 = vld [vmem:[%s3 + $0x8] sm:$0xff]
    %v1074 = vld [vmem:[%s3 + $0x10] sm:$0xff]
    %v1075 = vld [vmem:[%s3 + $0x18] sm:$0xff]
    %v1076 = vld [vmem:[%s3 + $0x20] sm:$0xff]
    %v1077 = vld [vmem:[%s3 + $0x28] sm:$0xff]
    %v1078 = vld [vmem:[%s3 + $0x30] sm:$0xff]
    %v1079 = vld [vmem:[%s3 + $0x38] sm:$0xff]
    %v1080 = vld [vmem:[%s3 + $0x40] sm:$0xff]
    %v1081 = vld [vmem:[%s3 + $0x48] sm:$0xff]
    %v1082 = vld [vmem:[%s3 + $0x50] sm:$0xff]
    %v1083 = vld [vmem:[%s3 + $0x58] sm:$0xff]
    %v1084 = vld [vmem:[%s3 + $0x60] sm:$0xff]
    %v1085 = vld [vmem:[%s3 + $0x68] sm:$0xff]
    %v1086 = vld [vmem:[%s3 + $0x70] sm:$0xff]
    %v1087 = vld [vmem:[%s3 + $0x78] sm:$0xff]
    %v1088 = vld [vmem:[%s3 + $0x80] sm:$0xff]
    %v1089 = vld [vmem:[%s3 + $0x88] sm:$0xff]
    %v1090 = vld [vmem:[%s3 + $0x90] sm:$0xff]
    %v1091 = vld [vmem:[%s3 + $0x98] sm:$0xff]
    %v1092 = vld [vmem:[%s3 + $0xa0] sm:$0xff]
    %v1093 = vld [vmem:[%s3 + $0xa8] sm:$0xff]
    %v1094 = vld [vmem:[%s3 + $0xb0] sm:$0xff]
    %v1095 = vld [vmem:[%s3 + $0xb8] sm:$0xff]
    %v1096 = vld [vmem:[%s3 + $0xc0] sm:$0xff]
    %v1097 = vld [vmem:[%s3 + $0xc8] sm:$0xff]
    %v1098 = vld [vmem:[%s3 + $0xd0] sm:$0xff]
    %v1099 = vld [vmem:[%s3 + $0xd8] sm:$0xff]
    %v1100 = vld [vmem:[%s3 + $0xe0] sm:$0xff]
    %v1101 = vld [vmem:[%s3 + $0xe8] sm:$0xff]
    %v1102 = vld [vmem:[%s3 + $0xf0] sm:$0xff]
    %v1103 = vld [vmem:[%s3 + $0xf8] sm:$0xff]
    %v1104 = vld [vmem:[%s3 + $0x100] sm:$0xff]
    %v1105 = vld [vmem:[%s3 + $0x108] sm:$0xff]
    %v1106 = vld [vmem:[%s3 + $0x110] sm:$0xff]
    %v1107 = vld [vmem:[%s3 + $0x118] sm:$0xff]
    %v1108 = vld [vmem:[%s3 + $0x120] sm:$0xff]
    %v1109 = vld [vmem:[%s3 + $0x128] sm:$0xff]
    %v1110 = vld [vmem:[%s3 + $0x130] sm:$0xff]
    %v1111 = vld [vmem:[%s3 + $0x138] sm:$0xff]
    %v1112 = vld [vmem:[%s3 + $0x140] sm:$0xff]
    %v1113 = vld [vmem:[%s3 + $0x148] sm:$0xff]
    %v1114 = vld [vmem:[%s3 + $0x150] sm:$0xff]
    %v1115 = vld [vmem:[%s3 + $0x158] sm:$0xff]
    %v1116 = vld [vmem:[%s3 + $0x160] sm:$0xff]
    %v1117 = vld [vmem:[%s3 + $0x168] sm:$0xff]
    %v1118 = vld [vmem:[%s3 + $0x170] sm:$0xff]
    %v1119 = vld [vmem:[%s3 + $0x178] sm:$0xff]
    %v1120 = vld [vmem:[#allocation7] sm:$0x1]
    %v1122 = vlaneseq
    %v1123 = vshrl.u32 %v1122, 7
    %v1124 = vsub.s32 0, %v1123
    %v1125 = vrot.slane %v1120, %v1124
    %1127 = vmatprep.subr.mxu0 0.0
    %1128 = vmatpush1.msra.mxu0 %v1072
    %1129 = vmatprep.subr.mxu0 0.0
    %1130 = vmatpush1.msra.mxu0 %v1073
    %1131 = vmatprep.subr.mxu0 0.0
    %1132 = vmatpush1.msra.mxu0 %v1074
    %1133 = vmatprep.subr.mxu0 0.0
    %1134 = vmatpush1.msra.mxu0 %v1075
    %1135 = vmatprep.subr.mxu0 0.0
    %1136 = vmatpush1.msra.mxu0 %v1076
    %1137 = vmatprep.subr.mxu0 0.0
    %1138 = vmatpush1.msra.mxu0 %v1077
    %1139 = vmatprep.subr.mxu0 0.0
    %1140 = vmatpush1.msra.mxu0 %v1078
    %1141 = vmatprep.subr.mxu0 0.0
    %1142 = vmatpush1.msra.mxu0 %v1079
    %1143 = vmatprep.subr.mxu0 0.0
    %1144 = vmatpush1.msra.mxu0 %v1080
    %1145 = vmatprep.subr.mxu0 0.0
    %1146 = vmatpush1.msra.mxu0 %v1081
    %1147 = vmatprep.subr.mxu0 0.0
    %1148 = vmatpush1.msra.mxu0 %v1082
    %1149 = vmatprep.subr.mxu0 0.0
    %1150 = vmatpush1.msra.mxu0 %v1083
    %1151 = vmatprep.subr.mxu0 0.0
    %1152 = vmatpush1.msra.mxu0 %v1084
    %1153 = vmatprep.subr.mxu0 0.0
    %1154 = vmatpush1.msra.mxu0 %v1085
    %1155 = vmatprep.subr.mxu0 0.0
    %1156 = vmatpush1.msra.mxu0 %v1086
    %1157 = vmatprep.subr.mxu0 0.0
    %1158 = vmatpush1.msra.mxu0 %v1087
    %1159 = vmatprep.subr.mxu0 0.0
    %1160 = vmatpush1.msra.mxu0 %v1088
    %1161 = vmatprep.subr.mxu0 0.0
    %1162 = vmatpush1.msra.mxu0 %v1089
    %1163 = vmatprep.subr.mxu0 0.0
    %1164 = vmatpush1.msra.mxu0 %v1090
    %1165 = vmatprep.subr.mxu0 0.0
    %1166 = vmatpush1.msra.mxu0 %v1091
    %1167 = vmatprep.subr.mxu0 0.0
    %1168 = vmatpush1.msra.mxu0 %v1092
    %1169 = vmatprep.subr.mxu0 0.0
    %1170 = vmatpush1.msra.mxu0 %v1093
    %1171 = vmatprep.subr.mxu0 0.0
    %1172 = vmatpush1.msra.mxu0 %v1094
    %1173 = vmatprep.subr.mxu0 0.0
    %1174 = vmatpush1.msra.mxu0 %v1095
    %1175 = vmatprep.subr.mxu0 0.0
    %1176 = vmatpush1.msra.mxu0 %v1096
    %1177 = vmatprep.subr.mxu0 0.0
    %1178 = vmatpush1.msra.mxu0 %v1097
    %1179 = vmatprep.subr.mxu0 0.0
    %1180 = vmatpush1.msra.mxu0 %v1098
    %1181 = vmatprep.subr.mxu0 0.0
    %1182 = vmatpush1.msra.mxu0 %v1099
    %1183 = vmatprep.subr.mxu0 0.0
    %1184 = vmatpush1.msra.mxu0 %v1100
    %1185 = vmatprep.subr.mxu0 0.0
    %1186 = vmatpush1.msra.mxu0 %v1101
    %1187 = vmatprep.subr.mxu0 0.0
    %1188 = vmatpush1.msra.mxu0 %v1102
    %1189 = vmatprep.subr.mxu0 0.0
    %1190 = vmatpush1.msra.mxu0 %v1103
    %1191 = vmatprep.mubr.f32.mxu0 %v1070
    %1192 = vmatmul.mubr.f32.gmra.mrb[0].mxu0 %v1069
    %v1193 = vpop.f32.mrb[0].mxu0
    %v1194 = vadd.f32 %v1125, %v1193
    %v1195 = vpop.f32.mrb[0].mxu0
    %1196 = vdwg.mxu0
    %1197 = vmatprep.subr.mxu0 0.0
    %1198 = vmatpush1.msra.mxu0 %v1104
    %1199 = vmatprep.subr.mxu0 0.0
    %1200 = vmatpush1.msra.mxu0 %v1105
    %1201 = vmatprep.subr.mxu0 0.0
    %1202 = vmatpush1.msra.mxu0 %v1106
    %1203 = vmatprep.subr.mxu0 0.0
    %1204 = vmatpush1.msra.mxu0 %v1107
    %1205 = vmatprep.subr.mxu0 0.0
    %1206 = vmatpush1.msra.mxu0 %v1108
    %1207 = vmatprep.subr.mxu0 0.0
    %1208 = vmatpush1.msra.mxu0 %v1109
    %1209 = vmatprep.subr.mxu0 0.0
    %1210 = vmatpush1.msra.mxu0 %v1110
    %1211 = vmatprep.subr.mxu0 0.0
    %1212 = vmatpush1.msra.mxu0 %v1111
    %1213 = vmatprep.subr.mxu0 0.0
    %1214 = vmatpush1.msra.mxu0 %v1112
    %1215 = vmatprep.subr.mxu0 0.0
    %1216 = vmatpush1.msra.mxu0 %v1113
    %1217 = vmatprep.subr.mxu0 0.0
    %1218 = vmatpush1.msra.mxu0 %v1114
    %1219 = vmatprep.subr.mxu0 0.0
    %1220 = vmatpush1.msra.mxu0 %v1115
    %1221 = vmatprep.subr.mxu0 0.0
    %1222 = vmatpush1.msra.mxu0 %v1116
    %1223 = vmatprep.subr.mxu0 0.0
    %1224 = vmatpush1.msra.mxu0 %v1117
    %1225 = vmatprep.subr.mxu0 0.0
    %1226 = vmatpush1.msra.mxu0 %v1118
    %1227 = vmatprep.subr.mxu0 0.0
    %1228 = vmatpush1.msra.mxu0 %v1119
    %1229 = vmatprep.subr.mxu0 0.0
    %1230 = vmatpush1.msra.mxu0 0.0
    %1231 = vmatprep.subr.mxu0 0.0
    %1232 = vmatpush1.msra.mxu0 0.0
    %1233 = vmatprep.subr.mxu0 0.0
    %1234 = vmatpush1.msra.mxu0 0.0
    %1235 = vmatprep.subr.mxu0 0.0
    %1236 = vmatpush1.msra.mxu0 0.0
    %1237 = vmatprep.subr.mxu0 0.0
    %1238 = vmatpush1.msra.mxu0 0.0
    %1239 = vmatprep.subr.mxu0 0.0
    %1240 = vmatpush1.msra.mxu0 0.0
    %1241 = vmatprep.subr.mxu0 0.0
    %1242 = vmatpush1.msra.mxu0 0.0
    %1243 = vmatprep.subr.mxu0 0.0
    %1244 = vmatpush1.msra.mxu0 0.0
    %1245 = vmatprep.subr.mxu0 0.0
    %1246 = vmatpush1.msra.mxu0 0.0
    %1247 = vmatprep.subr.mxu0 0.0
    %1248 = vmatpush1.msra.mxu0 0.0
    %1249 = vmatprep.subr.mxu0 0.0
    %1250 = vmatpush1.msra.mxu0 0.0
    %1251 = vmatprep.subr.mxu0 0.0
    %1252 = vmatpush1.msra.mxu0 0.0
    %1253 = vmatprep.subr.mxu0 0.0
    %1254 = vmatpush1.msra.mxu0 0.0
    %1255 = vmatprep.subr.mxu0 0.0
    %1256 = vmatpush1.msra.mxu0 0.0
    %1257 = vmatprep.subr.mxu0 0.0
    %1258 = vmatpush1.msra.mxu0 0.0
    %1259 = vmatprep.subr.mxu0 0.0
    %1260 = vmatpush1.msra.mxu0 0.0
    %1261 = vmatprep.mubr.f32.mxu0 0.0
    %1262 = vmatmul.mubr.f32.gmra.mrb[0].mxu0 %v1071
    %v1263 = vpop.f32.mrb[0].mxu0
    %v1264 = vadd.f32 %v1194, %v1263
    %v1265 = vpop.f32.mrb[0].mxu0
    %1266 = vdwg.mxu0
    %vm1267 = vcmask 74752
    %1268 = vst.msk [vmem:[#allocation8] sm:$0x3] %vm1267, %v1264
    // Predicated region
    $region34: #{_net_forward_impl.1} parent=1 // pred_check
      _
    $region35: #{_net_forward_impl.1} parent=1 // pred_check_branch
      %1270 = sbr.rel (0) target = $region37
    $region36: #{_net_forward_impl.1} parent=1 // pred_region
      %s1272 = ssub.s32 32, 32
      %1273 = vsyncadd [#allocation4], %s1272
      %s1275 = sshll.u32 [#allocation8], 4
      %s1276 = int_to_ptr.vmem [resolvable:$true] %s1275
      %1278 = dma.vmem_to_hbm [thread:$0]  %s1276, 32, %s5, [#allocation4]
    $region37: #{_net_forward_impl.1} parent=1 // pred_fallthru
      _
    // Predicated region
    $region38: #{_net_forward_impl.1} parent=1 // pred_check
      _
    $region39: #{_net_forward_impl.1} parent=1 // pred_check_branch
      %1280 = sbr.rel (0) target = $region41
    $region40: #{_net_forward_impl.1} parent=1 // pred_region
      %1281 = dma.done [#allocation4], 32
    $region41: #{_net_forward_impl.1} parent=1 // pred_fallthru
      _
    %1282 = vsyncpa [#allocation3], 1
    %1283 = vsyncpa [#allocation6], 1
    %1284 = vsyncpa [#allocation4], 1

</llo_original>
